<compile_context>
chip_gen: v7x
topology: tpu7x:2x2x1
jax: 0.10.0
libtpu: 0.0.40
codegen_flags: <defaults>
</compile_context>

<pallas_src>
import jax
import jax.numpy as jnp
import numpy as np
from jax.experimental import pallas as pl
from jax.experimental.pallas import tpu as pltpu

KSIZE = 3
NKERNELS = 16


# ------------------------------ Pallas kernel -------------------------------

def _cnn_fused_kernel(p_ref, cw_ref, cb_ref, lw_ref, lb_ref, o_ref):
    """One batch element per grid step.

    p_ref : (1, P, KKC)     im2col patches; rows = (oh, ow), cols = (cin, kh, kw)
    cw_ref: (KKC, COUT)     conv weight flattened with the same column ordering
    cb_ref: (1, COUT)       conv bias
    lw_ref: (NCLS, P, COUT) linear weight pre-permuted to the activation layout
    lb_ref: (1, NCLS)       linear bias
    o_ref : (1, 1, NCLS)    softmax probabilities for this batch element
    """
    ncls = lw_ref.shape[0]

    # Conv as one MXU GEMM + bias + ReLU.  Activation never leaves VMEM/vregs.
    acts = jnp.dot(p_ref[0], cw_ref[...], preferred_element_type=jnp.float32)
    acts = jnp.maximum(acts + cb_ref[...], 0.0)                     # (P, COUT)

    # Linear layer: scores[n] = sum_{p,c} acts[p,c] * lw[n,p,c].
    # ncls is tiny (5), so a statically-unrolled multiply+reduce on the
    # VPU/XLU is cheaper and safer than reshaping (P, COUT) -> (1, P*COUT)
    # for an MXU matvec.
    lane = jax.lax.broadcasted_iota(jnp.int32, (1, ncls), 1)
    scores = lb_ref[...]                                            # (1, NCLS)
    for n in range(ncls):                                           # static unroll
        t = acts * lw_ref[n]                                        # (P, COUT)
        s = jnp.sum(jnp.sum(t, axis=0, keepdims=True), axis=1, keepdims=True)
        scores = scores + s * (lane == n).astype(jnp.float32)

    # Numerically-stable softmax; reciprocal on the EUP slot.
    m = jnp.max(scores, axis=1, keepdims=True)
    e = jnp.exp(scores - m)
    denom = jnp.sum(e, axis=1, keepdims=True)
    o_ref[0] = e * pl.reciprocal(denom, approx=True)


# ------------------------------ host wrappers --------------------------------

def _im2col(x_nchw, k):
    """NCHW -> (B, OH*OW, Cin*k*k); column ordering (cin, kh, kw), i.e. torch's
    Conv2d weight-flatten order.  Runs as one tiny XLA fusion (~56 KB)."""
    b, c, h, w = x_nchw.shape
    oh, ow = h - k + 1, w - k + 1
    x = jnp.transpose(x_nchw, (0, 2, 3, 1))                         # NHWC, ~8 KB
    taps = [x[:, i:i + oh, j:j + ow, :] for i in range(k) for j in range(k)]
    p = jnp.stack(taps, axis=-1)                                    # (B,OH,OW,C,k*k)
    return p.reshape(b, oh * ow, c * k * k)


@jax.jit
def cnn_forward(kparams, x):
    """x: (B, C, H, W) float32 -> softmax probabilities (B, nclasses)."""
    b = x.shape[0]
    patches = _im2col(x, KSIZE)                                     # (B, P, KKC)
    _, p_len, kkc = patches.shape
    cout = kparams["conv_w2d"].shape[1]
    ncls = kparams["lin_b2d"].shape[1]

    flops = 2 * b * p_len * (kkc * cout + cout * ncls)
    bytes_accessed = 4 * (patches.size + kparams["conv_w2d"].size +
                          kparams["conv_b2d"].size + kparams["lin_w3"].size +
                          kparams["lin_b2d"].size + b * ncls)

    out = pl.pallas_call(
        _cnn_fused_kernel,
        out_shape=jax.ShapeDtypeStruct((b, 1, ncls), jnp.float32),
        grid=(b,),
        in_specs=[
            pl.BlockSpec((1, p_len, kkc), lambda i: (i, 0, 0)),     # per-image patches
            pl.BlockSpec((kkc, cout), lambda i: (0, 0)),            # conv weight
            pl.BlockSpec((1, cout), lambda i: (0, 0)),              # conv bias
            pl.BlockSpec((ncls, p_len, cout), lambda i: (0, 0, 0)), # permuted lin w
            pl.BlockSpec((1, ncls), lambda i: (0, 0)),              # lin bias
        ],
        out_specs=pl.BlockSpec((1, 1, ncls), lambda i: (i, 0, 0)),
        compiler_params=pltpu.CompilerParams(
            dimension_semantics=("parallel",)),
        cost_estimate=pl.CostEstimate(
            flops=flops,
            transcendentals=b * (ncls + 1),
            bytes_accessed=bytes_accessed),
    )(patches, kparams["conv_w2d"], kparams["conv_b2d"],
      kparams["lin_w3"], kparams["lin_b2d"])
    return out[:, 0, :]


# ------------------------------- parameters ----------------------------------

def init_params(key, inshape, nclasses):
    """Torch-layout params, matching the module's init (xavier conv, N(0,0.01) linear)."""
    ch, h, w = inshape
    oh, ow = h - KSIZE + 1, w - KSIZE + 1
    nfts = NKERNELS * oh * ow
    k_conv, k_lin = jax.random.split(key)

    fan_in = ch * KSIZE * KSIZE
    fan_out = NKERNELS * KSIZE * KSIZE
    limit = float(np.sqrt(6.0 / (fan_in + fan_out)))
    conv_w = jax.random.uniform(k_conv, (NKERNELS, ch, KSIZE, KSIZE),
                                jnp.float32, -limit, limit)
    conv_b = jnp.zeros((NKERNELS,), jnp.float32)
    lin_w = 0.01 * jax.random.normal(k_lin, (nclasses, nfts), jnp.float32)
    lin_b = jnp.zeros((nclasses,), jnp.float32)
    return dict(conv_w=conv_w, conv_b=conv_b, lin_w=lin_w, lin_b=lin_b)


def prepare_params(params, inshape):
    """One-time re-layout of the torch-style params into kernel layouts.
    The linear-weight permutation here replaces the old per-forward
    NHWC->NCHW activation transpose."""
    ch, h, w = inshape
    oh, ow = h - KSIZE + 1, w - KSIZE + 1
    ncls = params["lin_w"].shape[0]

    conv_w2d = params["conv_w"].reshape(NKERNELS, ch * KSIZE * KSIZE).T  # (KKC, COUT)
    conv_b2d = params["conv_b"].reshape(1, NKERNELS)
    lin_w3 = params["lin_w"].reshape(ncls, NKERNELS, oh, ow)
    lin_w3 = jnp.transpose(lin_w3, (0, 2, 3, 1)).reshape(ncls, oh * ow, NKERNELS)
    lin_b2d = params["lin_b"].reshape(1, ncls)
    return dict(conv_w2d=conv_w2d, conv_b2d=conv_b2d,
                lin_w3=lin_w3, lin_b2d=lin_b2d)


def reference_forward(params, x):
    """Pure-JAX reference identical to the torch module's forward."""
    y = jax.lax.conv_general_dilated(
        x, params["conv_w"], (1, 1), "VALID",
        dimension_numbers=("NCHW", "OIHW", "NCHW"),
        precision=jax.lax.Precision.HIGHEST)
    y = jnp.maximum(y + params["conv_b"][None, :, None, None], 0.0)
    y = y.reshape(x.shape[0], -1)
    scores = jnp.dot(y, params["lin_w"].T,
                     precision=jax.lax.Precision.HIGHEST) + params["lin_b"]
    return jax.nn.softmax(scores, axis=1)


# ----------------------------------- main ------------------------------------

if __name__ == "__main__":
    B = 2
    inshape = (4, 16, 16)       # (C, H, W)
    nclasses = 5

    key = jax.random.PRNGKey(0)
    k_params, k_x = jax.random.split(key)

    params = init_params(k_params, inshape, nclasses)
    kparams = prepare_params(params, inshape)      # one-time, off the hot path
    x = jax.random.normal(k_x, (B,) + inshape, jnp.float32)

    probs = jax.block_until_ready(cnn_forward(kparams, x))

    assert probs.shape == (B, nclasses)
    # approx reciprocal -> allow a loose-but-meaningful tolerance
    assert np.allclose(np.asarray(jnp.sum(probs, axis=1)), 1.0, atol=5e-3)
    ref = np.asarray(reference_forward(params, x))
    assert np.allclose(np.asarray(probs), ref, atol=5e-3)

    print("KERNEL_OK")
</pallas_src>

<mosaic_0001>
module attributes {stable_mosaic.version = 11 : i64} {
  func.func @_cnn_fused_kernel(%arg0: i32, %arg1: memref<1x196x36xf32, #tpu.memory_space<vmem>>, %arg2: memref<36x16xf32, #tpu.memory_space<vmem>>, %arg3: memref<1x16xf32, #tpu.memory_space<vmem>>, %arg4: memref<5x196x16xf32, #tpu.memory_space<vmem>>, %arg5: memref<1x5xf32, #tpu.memory_space<vmem>>, %arg6: memref<1x1x5xf32, #tpu.memory_space<vmem>>) attributes {dimension_semantics = [#tpu.dimension_semantics<parallel>], iteration_bounds = array<i64: 2>, scalar_prefetch = 0 : i64, scratch_operands = 0 : i64, tpu.core_type = #tpu.core_type<tc>, window_params = [{transform_indices = @transform_0, window_bounds = array<i64: 1, 196, 36>}, {pipeline_mode = #tpu.pipeline_mode<synchronous>, transform_indices = @transform_1, window_bounds = array<i64: 36, 16>}, {pipeline_mode = #tpu.pipeline_mode<synchronous>, transform_indices = @transform_2, window_bounds = array<i64: 1, 16>}, {pipeline_mode = #tpu.pipeline_mode<synchronous>, transform_indices = @transform_3, window_bounds = array<i64: 5, 196, 16>}, {pipeline_mode = #tpu.pipeline_mode<synchronous>, transform_indices = @transform_4, window_bounds = array<i64: 1, 5>}, {transform_indices = @transform_5, window_bounds = array<i64: 1, 1, 5>}]} {
    %c0 = arith.constant 0 : index
    %c0_0 = arith.constant 0 : index
    %c0_1 = arith.constant 0 : index
    %0 = vector.load %arg1[%c0, %c0_0, %c0_1] : memref<1x196x36xf32, #tpu.memory_space<vmem>>, vector<1x196x36xf32>
    %1 = vector.shape_cast %0 : vector<1x196x36xf32> to vector<196x36xf32>
    %c0_2 = arith.constant 0 : index
    %c0_3 = arith.constant 0 : index
    %2 = vector.load %arg2[%c0_2, %c0_3] : memref<36x16xf32, #tpu.memory_space<vmem>>, vector<36x16xf32>
    %cst = arith.constant dense<0.000000e+00> : vector<196x16xf32>
    %3 = tpu.matmul %1, %2, %cst {dimension_numbers = #tpu.dot_dimension_numbers<[1], [0], [0], [1], [0, 0, 1, 1], [], []>} : vector<196x36xf32>, vector<36x16xf32>, vector<196x16xf32> -> vector<196x16xf32>
    %c0_4 = arith.constant 0 : index
    %c0_5 = arith.constant 0 : index
    %4 = vector.load %arg3[%c0_4, %c0_5] : memref<1x16xf32, #tpu.memory_space<vmem>>, vector<1x16xf32>
    %5 = vector.broadcast %4 : vector<1x16xf32> to vector<196x16xf32>
    %6 = arith.addf %3, %5 : vector<196x16xf32>
    %cst_6 = arith.constant 0.000000e+00 : f32
    %7 = vector.broadcast %cst_6 : f32 to vector<196x16xf32>
    %8 = arith.maximumf %6, %7 : vector<196x16xf32>
    %9 = tpu.iota {dimensions = array<i32: 1>} : vector<1x5xi32>
    %c0_7 = arith.constant 0 : index
    %c0_8 = arith.constant 0 : index
    %10 = vector.load %arg5[%c0_7, %c0_8] : memref<1x5xf32, #tpu.memory_space<vmem>>, vector<1x5xf32>
    %c0_9 = arith.constant 0 : index
    %c0_10 = arith.constant 0 : index
    %c0_11 = arith.constant 0 : index
    %11 = vector.load %arg4[%c0_9, %c0_10, %c0_11] : memref<5x196x16xf32, #tpu.memory_space<vmem>>, vector<1x196x16xf32>
    %12 = vector.shape_cast %11 : vector<1x196x16xf32> to vector<196x16xf32>
    %13 = arith.mulf %8, %12 : vector<196x16xf32>
    %cst_12 = arith.constant dense<0.000000e+00> : vector<16xf32>
    %14 = vector.multi_reduction <add>, %13, %cst_12 [0] : vector<196x16xf32> to vector<16xf32>
    %15 = vector.shape_cast %14 : vector<16xf32> to vector<1x16xf32>
    %cst_13 = arith.constant dense<0.000000e+00> : vector<1xf32>
    %16 = vector.multi_reduction <add>, %15, %cst_13 [1] : vector<1x16xf32> to vector<1xf32>
    %17 = vector.shape_cast %16 : vector<1xf32> to vector<1x1xf32>
    %c0_i32 = arith.constant 0 : i32
    %18 = vector.broadcast %c0_i32 : i32 to vector<1x5xi32>
    %19 = arith.cmpi eq, %9, %18 : vector<1x5xi32>
    %20 = arith.extui %19 : vector<1x5xi1> to vector<1x5xi32>
    %21 = arith.sitofp %20 : vector<1x5xi32> to vector<1x5xf32>
    %22 = vector.broadcast %17 : vector<1x1xf32> to vector<1x5xf32>
    %23 = arith.mulf %22, %21 : vector<1x5xf32>
    %24 = arith.addf %10, %23 : vector<1x5xf32>
    %c1 = arith.constant 1 : index
    %c0_14 = arith.constant 0 : index
    %c0_15 = arith.constant 0 : index
    %25 = vector.load %arg4[%c1, %c0_14, %c0_15] : memref<5x196x16xf32, #tpu.memory_space<vmem>>, vector<1x196x16xf32>
    %26 = vector.shape_cast %25 : vector<1x196x16xf32> to vector<196x16xf32>
    %27 = arith.mulf %8, %26 : vector<196x16xf32>
    %cst_16 = arith.constant dense<0.000000e+00> : vector<16xf32>
    %28 = vector.multi_reduction <add>, %27, %cst_16 [0] : vector<196x16xf32> to vector<16xf32>
    %29 = vector.shape_cast %28 : vector<16xf32> to vector<1x16xf32>
    %cst_17 = arith.constant dense<0.000000e+00> : vector<1xf32>
    %30 = vector.multi_reduction <add>, %29, %cst_17 [1] : vector<1x16xf32> to vector<1xf32>
    %31 = vector.shape_cast %30 : vector<1xf32> to vector<1x1xf32>
    %c1_i32 = arith.constant 1 : i32
    %32 = vector.broadcast %c1_i32 : i32 to vector<1x5xi32>
    %33 = arith.cmpi eq, %9, %32 : vector<1x5xi32>
    %34 = arith.extui %33 : vector<1x5xi1> to vector<1x5xi32>
    %35 = arith.sitofp %34 : vector<1x5xi32> to vector<1x5xf32>
    %36 = vector.broadcast %31 : vector<1x1xf32> to vector<1x5xf32>
    %37 = arith.mulf %36, %35 : vector<1x5xf32>
    %38 = arith.addf %24, %37 : vector<1x5xf32>
    %c2 = arith.constant 2 : index
    %c0_18 = arith.constant 0 : index
    %c0_19 = arith.constant 0 : index
    %39 = vector.load %arg4[%c2, %c0_18, %c0_19] : memref<5x196x16xf32, #tpu.memory_space<vmem>>, vector<1x196x16xf32>
    %40 = vector.shape_cast %39 : vector<1x196x16xf32> to vector<196x16xf32>
    %41 = arith.mulf %8, %40 : vector<196x16xf32>
    %cst_20 = arith.constant dense<0.000000e+00> : vector<16xf32>
    %42 = vector.multi_reduction <add>, %41, %cst_20 [0] : vector<196x16xf32> to vector<16xf32>
    %43 = vector.shape_cast %42 : vector<16xf32> to vector<1x16xf32>
    %cst_21 = arith.constant dense<0.000000e+00> : vector<1xf32>
    %44 = vector.multi_reduction <add>, %43, %cst_21 [1] : vector<1x16xf32> to vector<1xf32>
    %45 = vector.shape_cast %44 : vector<1xf32> to vector<1x1xf32>
    %c2_i32 = arith.constant 2 : i32
    %46 = vector.broadcast %c2_i32 : i32 to vector<1x5xi32>
    %47 = arith.cmpi eq, %9, %46 : vector<1x5xi32>
    %48 = arith.extui %47 : vector<1x5xi1> to vector<1x5xi32>
    %49 = arith.sitofp %48 : vector<1x5xi32> to vector<1x5xf32>
    %50 = vector.broadcast %45 : vector<1x1xf32> to vector<1x5xf32>
    %51 = arith.mulf %50, %49 : vector<1x5xf32>
    %52 = arith.addf %38, %51 : vector<1x5xf32>
    %c3 = arith.constant 3 : index
    %c0_22 = arith.constant 0 : index
    %c0_23 = arith.constant 0 : index
    %53 = vector.load %arg4[%c3, %c0_22, %c0_23] : memref<5x196x16xf32, #tpu.memory_space<vmem>>, vector<1x196x16xf32>
    %54 = vector.shape_cast %53 : vector<1x196x16xf32> to vector<196x16xf32>
    %55 = arith.mulf %8, %54 : vector<196x16xf32>
    %cst_24 = arith.constant dense<0.000000e+00> : vector<16xf32>
    %56 = vector.multi_reduction <add>, %55, %cst_24 [0] : vector<196x16xf32> to vector<16xf32>
    %57 = vector.shape_cast %56 : vector<16xf32> to vector<1x16xf32>
    %cst_25 = arith.constant dense<0.000000e+00> : vector<1xf32>
    %58 = vector.multi_reduction <add>, %57, %cst_25 [1] : vector<1x16xf32> to vector<1xf32>
    %59 = vector.shape_cast %58 : vector<1xf32> to vector<1x1xf32>
    %c3_i32 = arith.constant 3 : i32
    %60 = vector.broadcast %c3_i32 : i32 to vector<1x5xi32>
    %61 = arith.cmpi eq, %9, %60 : vector<1x5xi32>
    %62 = arith.extui %61 : vector<1x5xi1> to vector<1x5xi32>
    %63 = arith.sitofp %62 : vector<1x5xi32> to vector<1x5xf32>
    %64 = vector.broadcast %59 : vector<1x1xf32> to vector<1x5xf32>
    %65 = arith.mulf %64, %63 : vector<1x5xf32>
    %66 = arith.addf %52, %65 : vector<1x5xf32>
    %c4 = arith.constant 4 : index
    %c0_26 = arith.constant 0 : index
    %c0_27 = arith.constant 0 : index
    %67 = vector.load %arg4[%c4, %c0_26, %c0_27] : memref<5x196x16xf32, #tpu.memory_space<vmem>>, vector<1x196x16xf32>
    %68 = vector.shape_cast %67 : vector<1x196x16xf32> to vector<196x16xf32>
    %69 = arith.mulf %8, %68 : vector<196x16xf32>
    %cst_28 = arith.constant dense<0.000000e+00> : vector<16xf32>
    %70 = vector.multi_reduction <add>, %69, %cst_28 [0] : vector<196x16xf32> to vector<16xf32>
    %71 = vector.shape_cast %70 : vector<16xf32> to vector<1x16xf32>
    %cst_29 = arith.constant dense<0.000000e+00> : vector<1xf32>
    %72 = vector.multi_reduction <add>, %71, %cst_29 [1] : vector<1x16xf32> to vector<1xf32>
    %73 = vector.shape_cast %72 : vector<1xf32> to vector<1x1xf32>
    %c4_i32 = arith.constant 4 : i32
    %74 = vector.broadcast %c4_i32 : i32 to vector<1x5xi32>
    %75 = arith.cmpi eq, %9, %74 : vector<1x5xi32>
    %76 = arith.extui %75 : vector<1x5xi1> to vector<1x5xi32>
    %77 = arith.sitofp %76 : vector<1x5xi32> to vector<1x5xf32>
    %78 = vector.broadcast %73 : vector<1x1xf32> to vector<1x5xf32>
    %79 = arith.mulf %78, %77 : vector<1x5xf32>
    %80 = arith.addf %66, %79 : vector<1x5xf32>
    %cst_30 = arith.constant dense<0xFF800000> : vector<1xf32>
    %81 = vector.multi_reduction <maximumf>, %80, %cst_30 [1] : vector<1x5xf32> to vector<1xf32>
    %82 = vector.shape_cast %81 : vector<1xf32> to vector<1x1xf32>
    %83 = vector.broadcast %82 : vector<1x1xf32> to vector<1x5xf32>
    %84 = arith.subf %80, %83 : vector<1x5xf32>
    %85 = math.exp %84 : vector<1x5xf32>
    %cst_31 = arith.constant dense<0.000000e+00> : vector<1xf32>
    %86 = vector.multi_reduction <add>, %85, %cst_31 [1] : vector<1x5xf32> to vector<1xf32>
    %87 = vector.shape_cast %86 : vector<1xf32> to vector<1x1xf32>
    %88 = tpu.reciprocal %87 {approx = true} : vector<1x1xf32> -> vector<1x1xf32>
    %89 = vector.broadcast %88 : vector<1x1xf32> to vector<1x5xf32>
    %90 = arith.mulf %85, %89 : vector<1x5xf32>
    %c0_32 = arith.constant 0 : index
    %c0_33 = arith.constant 0 : index
    %c0_34 = arith.constant 0 : index
    %91 = vector.load %arg6[%c0_32, %c0_33, %c0_34] : memref<1x1x5xf32, #tpu.memory_space<vmem>>, vector<1x1x5xf32>
    %92 = vector.shape_cast %91 : vector<1x1x5xf32> to vector<1x5xf32>
    %93 = vector.shape_cast %90 : vector<1x5xf32> to vector<1x1x5xf32>
    tpu.vector_store %arg6[%c0_32, %c0_33, %c0_34], %93 {strides = array<i32>} : memref<1x1x5xf32, #tpu.memory_space<vmem>>, vector<1x1x5xf32>,
    return
  }
  func.func @transform_0(%arg0: i32) -> (i32, i32, i32) {
    %c0_i32 = arith.constant 0 : i32
    %c0_i32_0 = arith.constant 0 : i32
    %c0_i32_1 = arith.constant 0 : i32
    return %arg0, %c0_i32, %c0_i32_0 : i32, i32, i32
  }
  func.func @transform_1(%arg0: i32) -> (i32, i32) {
    %c0_i32 = arith.constant 0 : i32
    %c0_i32_0 = arith.constant 0 : i32
    %c0_i32_1 = arith.constant 0 : i32
    return %c0_i32, %c0_i32_0 : i32, i32
  }
  func.func @transform_2(%arg0: i32) -> (i32, i32) {
    %c0_i32 = arith.constant 0 : i32
    %c0_i32_0 = arith.constant 0 : i32
    %c0_i32_1 = arith.constant 0 : i32
    return %c0_i32, %c0_i32_0 : i32, i32
  }
  func.func @transform_3(%arg0: i32) -> (i32, i32, i32) {
    %c0_i32 = arith.constant 0 : i32
    %c0_i32_0 = arith.constant 0 : i32
    %c0_i32_1 = arith.constant 0 : i32
    %c0_i32_2 = arith.constant 0 : i32
    return %c0_i32, %c0_i32_0, %c0_i32_1 : i32, i32, i32
  }
  func.func @transform_4(%arg0: i32) -> (i32, i32) {
    %c0_i32 = arith.constant 0 : i32
    %c0_i32_0 = arith.constant 0 : i32
    %c0_i32_1 = arith.constant 0 : i32
    return %c0_i32, %c0_i32_0 : i32, i32
  }
  func.func @transform_5(%arg0: i32) -> (i32, i32, i32) {
    %c0_i32 = arith.constant 0 : i32
    %c0_i32_0 = arith.constant 0 : i32
    %c0_i32_1 = arith.constant 0 : i32
    return %arg0, %c0_i32, %c0_i32_0 : i32, i32, i32
  }
}

</mosaic_0001>

<llo_original>
// kernel: cnn_forward.1
$region0: #{cnn_forward.1}
  #allocation0 [shape = 'u32[]', space=smem, size = 0x4, offset = 0x4, fixed_abs, tag = 'smem constant byte address 0x4 - core index']
  #allocation1 [shape = 'u32[144,128]{1,0:T(1,128)}', space=vmem, size = 0x12000, scoped, tag = 'internal scratch']
  %s0 = inlined_call_operand.vmem [shape: f32[2,196,36], index: 0, kind: input, shape index: {}]
  %s1 = inlined_call_operand.vmem [shape: f32[36,16], index: 1, kind: input, shape index: {}]
  %s2 = inlined_call_operand.vmem [shape: f32[1,16], index: 2, kind: input, shape index: {}]
  %s3 = inlined_call_operand.vmem [shape: f32[5,196,16], index: 3, kind: input, shape index: {}]
  %s4 = inlined_call_operand.vmem [shape: f32[1,5], index: 4, kind: input, shape index: {}]
  %s5 = inlined_call_operand.hbm [shape: f32[2,1,5], index: 5, kind: output, shape index: {}]
  %s6 = sld [smem:[#allocation0]]
  $region53: #{cnn_forward.1} parent=0
    _
  %s8 = ssub.s32 1, %s6
  %s9 = scalar_select 0, %s8, %s6
  $region1: #{cnn_forward.1} parent=0
    #allocation2 [shape = 'u8[1024]{0}', space=vmem, size = 0x400, scoped, tag = 'output window, operand 0']
    #allocation3 [shape = 's32[2]{0}', space=sflag, size = 0x8, scoped, tag = 'scoped memory for cnn_forward.1']
    %10 = vsyncpa [#allocation3], 0
    %s11 = scalar_lea.sflag [#allocation3], 1
    %12 = vsyncpa %s11, 0
    loop: start=0, step=1, limit=4
    $region2: #{cnn_forward.1} parent=1 // loop_pre_header
      _
    $region3: #{cnn_forward.1} parent=1 // loop_header
      %s14 = sphi 0, %s18
      %p15 = scmp.ge.s32.totalorder %s14, 4
      %s24 = sphi 0, %s26
      %s27 = sphi 0, %s24
      %s28 = sphi 0, %s27
      %s44 = sphi 0, %s28
      %s48 = sphi 0, %s48
      %s50 = sphi 0, %s48
      %s51 = sphi 0, %s50
      %s65 = sphi 0, %s51
      %s69 = sphi 0, %s69
      %s71 = sphi 0, %s69
      %s72 = sphi 0, %s71
      %s86 = sphi 0, %s72
      %s90 = sphi 0, %s90
      %s92 = sphi 0, %s90
      %s93 = sphi 0, %s92
      %s107 = sphi 0, %s93
      %s111 = sphi 0, %s111
      %s113 = sphi 0, %s111
      %s114 = sphi 0, %s113
      %s128 = sphi 0, %s114
      %s134 = sphi 0, %s136
      %s137 = sphi 0, %s134
      %s138 = sphi 0, %s137
      %s154 = sphi 0, %s138
    $region4: #{cnn_forward.1} parent=1 // loop_header_branch
      %17 = sbr.rel (%p15) target = $region8
    $region5: #{cnn_forward.1} parent=1 // loop_body
      %s19 = ssub.s32 %s14, 1
      %s20 = ssub.s32 %s14, 2
      %s21 = sadd.s32 %s14, 1
      %s22 = ssub.s32 %s14, %s21
      %p23 = scmp.eq.s32.totalorder %s22, 0
      %s25 = sadd.s32 %s24, 1
      %s26 = scalar_select %p23, %s24, %s25
      %p29 = pneg %p23
      %p30 = scmp.eq.s32.totalorder %s14, 1
      %p31 = por %p29, %p30
      %p32 = scmp.ne.s32.totalorder %s24, %s27
      %p33 = scmp.eq.s32.totalorder %s14, 0
      %p34 = por %p32, %p33
      %p35 = scmp.ne.s32.totalorder %s24, %s27
      %p36 = scmp.eq.s32.totalorder %s19, 1
      %p37 = por %p35, %p36
      %p38 = scmp.ne.s32.totalorder %s27, %s28
      %p39 = scmp.eq.s32.totalorder %s19, 0
      %p40 = por %p38, %p39
      %p41 = scmp.ne.s32.totalorder %s27, %s28
      %p42 = scmp.eq.s32.totalorder %s20, 1
      %p43 = por %p41, %p42
      %p45 = scmp.ne.s32.totalorder %s28, %s44
      %p46 = scmp.eq.s32.totalorder %s20, 0
      %p47 = por %p45, %p46
      %s49 = sadd.s32 %s48, 1
      %p52 = scmp.eq.s32.totalorder %s14, 1
      %p53 = scmp.ne.s32.totalorder %s48, %s50
      %p54 = scmp.eq.s32.totalorder %s14, 0
      %p55 = por %p53, %p54
      %p56 = scmp.ne.s32.totalorder %s48, %s50
      %p57 = scmp.eq.s32.totalorder %s19, 1
      %p58 = por %p56, %p57
      %p59 = scmp.ne.s32.totalorder %s50, %s51
      %p60 = scmp.eq.s32.totalorder %s19, 0
      %p61 = por %p59, %p60
      %p62 = scmp.ne.s32.totalorder %s50, %s51
      %p63 = scmp.eq.s32.totalorder %s20, 1
      %p64 = por %p62, %p63
      %p66 = scmp.ne.s32.totalorder %s51, %s65
      %p67 = scmp.eq.s32.totalorder %s20, 0
      %p68 = por %p66, %p67
      %s70 = sadd.s32 %s69, 1
      %p73 = scmp.eq.s32.totalorder %s14, 1
      %p74 = scmp.ne.s32.totalorder %s69, %s71
      %p75 = scmp.eq.s32.totalorder %s14, 0
      %p76 = por %p74, %p75
      %p77 = scmp.ne.s32.totalorder %s69, %s71
      %p78 = scmp.eq.s32.totalorder %s19, 1
      %p79 = por %p77, %p78
      %p80 = scmp.ne.s32.totalorder %s71, %s72
      %p81 = scmp.eq.s32.totalorder %s19, 0
      %p82 = por %p80, %p81
      %p83 = scmp.ne.s32.totalorder %s71, %s72
      %p84 = scmp.eq.s32.totalorder %s20, 1
      %p85 = por %p83, %p84
      %p87 = scmp.ne.s32.totalorder %s72, %s86
      %p88 = scmp.eq.s32.totalorder %s20, 0
      %p89 = por %p87, %p88
      %s91 = sadd.s32 %s90, 1
      %p94 = scmp.eq.s32.totalorder %s14, 1
      %p95 = scmp.ne.s32.totalorder %s90, %s92
      %p96 = scmp.eq.s32.totalorder %s14, 0
      %p97 = por %p95, %p96
      %p98 = scmp.ne.s32.totalorder %s90, %s92
      %p99 = scmp.eq.s32.totalorder %s19, 1
      %p100 = por %p98, %p99
      %p101 = scmp.ne.s32.totalorder %s92, %s93
      %p102 = scmp.eq.s32.totalorder %s19, 0
      %p103 = por %p101, %p102
      %p104 = scmp.ne.s32.totalorder %s92, %s93
      %p105 = scmp.eq.s32.totalorder %s20, 1
      %p106 = por %p104, %p105
      %p108 = scmp.ne.s32.totalorder %s93, %s107
      %p109 = scmp.eq.s32.totalorder %s20, 0
      %p110 = por %p108, %p109
      %s112 = sadd.s32 %s111, 1
      %p115 = scmp.eq.s32.totalorder %s14, 1
      %p116 = scmp.ne.s32.totalorder %s111, %s113
      %p117 = scmp.eq.s32.totalorder %s14, 0
      %p118 = por %p116, %p117
      %p119 = scmp.ne.s32.totalorder %s111, %s113
      %p120 = scmp.eq.s32.totalorder %s19, 1
      %p121 = por %p119, %p120
      %p122 = scmp.ne.s32.totalorder %s113, %s114
      %p123 = scmp.eq.s32.totalorder %s19, 0
      %p124 = por %p122, %p123
      %p125 = scmp.ne.s32.totalorder %s113, %s114
      %p126 = scmp.eq.s32.totalorder %s20, 1
      %p127 = por %p125, %p126
      %p129 = scmp.ne.s32.totalorder %s114, %s128
      %p130 = scmp.eq.s32.totalorder %s20, 0
      %p131 = por %p129, %p130
      %s132 = ssub.s32 %s14, %s21
      %p133 = scmp.eq.s32.totalorder %s132, 0
      %s135 = sadd.s32 %s134, 1
      %s136 = scalar_select %p133, %s134, %s135
      %p139 = pneg %p133
      %p140 = scmp.eq.s32.totalorder %s14, 1
      %p141 = por %p139, %p140
      %p142 = scmp.ne.s32.totalorder %s134, %s137
      %p143 = scmp.eq.s32.totalorder %s14, 0
      %p144 = por %p142, %p143
      %p145 = scmp.ne.s32.totalorder %s134, %s137
      %p146 = scmp.eq.s32.totalorder %s19, 1
      %p147 = por %p145, %p146
      %p148 = scmp.ne.s32.totalorder %s137, %s138
      %p149 = scmp.eq.s32.totalorder %s19, 0
      %p150 = por %p148, %p149
      %p151 = scmp.ne.s32.totalorder %s137, %s138
      %p152 = scmp.eq.s32.totalorder %s20, 1
      %p153 = por %p151, %p152
      %p155 = scmp.ne.s32.totalorder %s138, %s154
      %p156 = scmp.eq.s32.totalorder %s20, 0
      %p157 = por %p155, %p156
      %p158 = scmp.le.s32.totalorder 1, %s14
      %p159 = scmp.lt.s32.totalorder %s14, 3
      %p160 = pnand %p158, %p159
      %p161 = pneg %p160
      // Predicated region
      $region9: #{cnn_forward.1} parent=5 // pred_check
        _
      $region10: #{cnn_forward.1} parent=5 // pred_check_branch
        %163 = sbr.rel (%p160) target = $region12
      $region11: #{cnn_forward.1} parent=5 // pred_region
        %s164 = ssub.s32 %s14, 1
        // Predicated region
        $region13: #{cnn_forward.1} parent=11 // pred_check
          %p165 = pneg %p61
        $region14: #{cnn_forward.1} parent=11 // pred_check_branch
          %167 = sbr.rel (%p165) target = $region16
        $region15: #{cnn_forward.1} parent=11 // pred_region
          _
        $region16: #{cnn_forward.1} parent=11 // pred_fallthru
          _
        // Predicated region
        $region17: #{cnn_forward.1} parent=11 // pred_check
          %p168 = pneg %p82
        $region18: #{cnn_forward.1} parent=11 // pred_check_branch
          %170 = sbr.rel (%p168) target = $region20
        $region19: #{cnn_forward.1} parent=11 // pred_region
          _
        $region20: #{cnn_forward.1} parent=11 // pred_fallthru
          _
        // Predicated region
        $region21: #{cnn_forward.1} parent=11 // pred_check
          %p171 = pneg %p103
        $region22: #{cnn_forward.1} parent=11 // pred_check_branch
          %173 = sbr.rel (%p171) target = $region24
        $region23: #{cnn_forward.1} parent=11 // pred_region
          _
        $region24: #{cnn_forward.1} parent=11 // pred_fallthru
          _
        // Predicated region
        $region25: #{cnn_forward.1} parent=11 // pred_check
          %p174 = pneg %p124
        $region26: #{cnn_forward.1} parent=11 // pred_check_branch
          %176 = sbr.rel (%p174) target = $region28
        $region27: #{cnn_forward.1} parent=11 // pred_region
          _
        $region28: #{cnn_forward.1} parent=11 // pred_fallthru
          _
      $region12: #{cnn_forward.1} parent=5 // pred_fallthru
        _
      %p177 = scmp.lt.s32.totalorder %s14, 2
      // Predicated region
      $region29: #{cnn_forward.1} parent=5 // pred_check
        %p178 = pneg %p177
      $region30: #{cnn_forward.1} parent=5 // pred_check_branch
        %180 = sbr.rel (%p178) target = $region32
      $region31: #{cnn_forward.1} parent=5 // pred_region
        // Predicated region
        $region33: #{cnn_forward.1} parent=31 // pred_check
          %p181 = pneg %p34
        $region34: #{cnn_forward.1} parent=31 // pred_check_branch
          %183 = sbr.rel (%p181) target = $region36
        $region35: #{cnn_forward.1} parent=31 // pred_region
          %p184 = scmp.lt.s32.totalorder %s14, 1
          %s185 = scalar_select %p184, %s14, 1
          %s186 = smul.addr %s185, 25
          %s187 = smul.addr %s186, 8
          %s188 = scalar_lea.vmem %s0, %s187
        $region36: #{cnn_forward.1} parent=31 // pred_fallthru
          _
      $region32: #{cnn_forward.1} parent=5 // pred_fallthru
        _
      %p189 = scmp.le.s32.totalorder 1, %s14
      %p190 = scmp.lt.s32.totalorder %s14, 3
      %p191 = pnand %p189, %p190
      %p192 = pneg %p191
      // Predicated region
      $region37: #{cnn_forward.1} parent=5 // pred_check
        _
      $region38: #{cnn_forward.1} parent=5 // pred_check_branch
        %194 = sbr.rel (%p191) target = $region40
      $region39: #{cnn_forward.1} parent=5 // pred_region
        %s195 = ssub.s32 %s14, 1
        %p196 = scmp.lt.s32.totalorder %s19, 1
        %s197 = scalar_select %p196, %s19, 1
        %s198 = smul.addr %s197, 25
        %s199 = smul.addr %s198, 8
        %s200 = scalar_lea.vmem %s0, %s199
        %p201 = pneg %p40
        %p202 = pneg %p37
        %p203 = pneg %p61
        %p204 = pneg %p58
        %p205 = pneg %p82
        %p206 = pneg %p79
        %p207 = pneg %p103
        %p208 = pneg %p100
        %p209 = pneg %p124
        %p210 = pneg %p121
        %p211 = pneg %p150
        %p212 = pneg %p147
        %s213 = sand.u32 %s137, 1
        %s214 = scalar_lea.sflag [#allocation3], %s213
        %s215 = sand.u32 %s137, 1
        %s216 = scalar_lea.vmem [#allocation2], %s215
        %p217 = scmp.lt.s32.totalorder %s19, 1
        %s218 = scalar_select %p217, %s19, 1
        %s219 = smul.addr %s218, 25
        %s220 = smul.addr %s219, 8
        %s221 = scalar_lea.vmem %s0, %s220
        %v222 = vld [vmem:[%s221] sm:$0xff]
        %v223 = vld [vmem:[%s221 + $0x8] sm:$0xff]
        %v224 = vld [vmem:[%s221 + $0x10] sm:$0xff]
        %v225 = vld [vmem:[%s221 + $0x18] sm:$0xff]
        %v226 = vld [vmem:[%s221 + $0x20] sm:$0xff]
        %v227 = vld [vmem:[%s221 + $0x28] sm:$0xff]
        %v228 = vld [vmem:[%s221 + $0x30] sm:$0xff]
        %v229 = vld [vmem:[%s221 + $0x38] sm:$0xff]
        %v230 = vld [vmem:[%s221 + $0x40] sm:$0xff]
        %v231 = vld [vmem:[%s221 + $0x48] sm:$0xff]
        %v232 = vld [vmem:[%s221 + $0x50] sm:$0xff]
        %v233 = vld [vmem:[%s221 + $0x58] sm:$0xff]
        %v234 = vld [vmem:[%s221 + $0x60] sm:$0xff]
        %v235 = vld [vmem:[%s221 + $0x68] sm:$0xff]
        %v236 = vld [vmem:[%s221 + $0x70] sm:$0xff]
        %v237 = vld [vmem:[%s221 + $0x78] sm:$0xff]
        %v238 = vld [vmem:[%s221 + $0x80] sm:$0xff]
        %v239 = vld [vmem:[%s221 + $0x88] sm:$0xff]
        %v240 = vld [vmem:[%s221 + $0x90] sm:$0xff]
        %v241 = vld [vmem:[%s221 + $0x98] sm:$0xff]
        %v242 = vld [vmem:[%s221 + $0xa0] sm:$0xff]
        %v243 = vld [vmem:[%s221 + $0xa8] sm:$0xff]
        %v244 = vld [vmem:[%s221 + $0xb0] sm:$0xff]
        %v245 = vld [vmem:[%s221 + $0xb8] sm:$0xff]
        %v246 = vld [vmem:[%s221 + $0xc0] sm:$0xf]
        %v247 = vld [vmem:[%s1] sm:$0xff]
        %v248 = vld [vmem:[%s1 + $0x8] sm:$0xff]
        %v249 = vld [vmem:[%s1 + $0x10] sm:$0xff]
        %v250 = vld [vmem:[%s1 + $0x18] sm:$0xff]
        %v251 = vld [vmem:[%s1 + $0x20] sm:$0xf]
        %v252 = vld [vmem:[%s2] sm:$0x1]
        %v254 = vlaneseq
        %v255 = vshrl.u32 %v254, 7
        %v256 = vsub.s32 0, %v255
        %v257 = vrot.slane %v252, %v256
        %vm259 = vcmask 293888
        %v261 = vsel %vm259, %v222, 0
        %v264 = vsel %vm259, %v223, 0
        %v267 = vsel %vm259, %v224, 0
        %v270 = vsel %vm259, %v225, 0
        %v273 = vsel %vm259, %v226, 0
        %v276 = vsel %vm259, %v227, 0
        %v279 = vsel %vm259, %v228, 0
        %v282 = vsel %vm259, %v229, 0
        %v285 = vsel %vm259, %v230, 0
        %v288 = vsel %vm259, %v231, 0
        %v291 = vsel %vm259, %v232, 0
        %v294 = vsel %vm259, %v233, 0
        %v297 = vsel %vm259, %v234, 0
        %v300 = vsel %vm259, %v235, 0
        %v303 = vsel %vm259, %v236, 0
        %v306 = vsel %vm259, %v237, 0
        %v309 = vsel %vm259, %v238, 0
        %v312 = vsel %vm259, %v239, 0
        %v315 = vsel %vm259, %v240, 0
        %v318 = vsel %vm259, %v241, 0
        %v321 = vsel %vm259, %v242, 0
        %v324 = vsel %vm259, %v243, 0
        %v327 = vsel %vm259, %v244, 0
        %v330 = vsel %vm259, %v245, 0
        %v333 = vsel %vm259, %v246, 0
        %vm335 = vcmask 1043456
        %v337 = vsel %vm335, %v251, 0
        %339 = vmatprep.subr.mxu0 0.0
        %340 = vmatpush1.msra.mxu0 %v247
        %341 = vmatprep.subr.mxu0 0.0
        %342 = vmatpush1.msra.mxu0 %v248
        %343 = vmatprep.subr.mxu0 0.0
        %344 = vmatpush1.msra.mxu0 %v249
        %345 = vmatprep.subr.mxu0 0.0
        %346 = vmatpush1.msra.mxu0 %v250
        %347 = vmatprep.subr.mxu0 0.0
        %348 = vmatpush1.msra.mxu0 %v337
        %349 = vmatprep.subr.mxu0 0.0
        %350 = vmatpush1.msra.mxu0 0.0
        %351 = vmatprep.subr.mxu0 0.0
        %352 = vmatpush1.msra.mxu0 0.0
        %353 = vmatprep.subr.mxu0 0.0
        %354 = vmatpush1.msra.mxu0 0.0
        %355 = vmatprep.subr.mxu0 0.0
        %356 = vmatpush1.msra.mxu0 0.0
        %357 = vmatprep.subr.mxu0 0.0
        %358 = vmatpush1.msra.mxu0 0.0
        %359 = vmatprep.subr.mxu0 0.0
        %360 = vmatpush1.msra.mxu0 0.0
        %361 = vmatprep.subr.mxu0 0.0
        %362 = vmatpush1.msra.mxu0 0.0
        %363 = vmatprep.subr.mxu0 0.0
        %364 = vmatpush1.msra.mxu0 0.0
        %365 = vmatprep.subr.mxu0 0.0
        %366 = vmatpush1.msra.mxu0 0.0
        %367 = vmatprep.subr.mxu0 0.0
        %368 = vmatpush1.msra.mxu0 0.0
        %369 = vmatprep.subr.mxu0 0.0
        %370 = vmatpush1.msra.mxu0 0.0
        %371 = vmatprep.subr.mxu0 0.0
        %372 = vmatpush1.msra.mxu0 0.0
        %373 = vmatprep.subr.mxu0 0.0
        %374 = vmatpush1.msra.mxu0 0.0
        %375 = vmatprep.subr.mxu0 0.0
        %376 = vmatpush1.msra.mxu0 0.0
        %377 = vmatprep.subr.mxu0 0.0
        %378 = vmatpush1.msra.mxu0 0.0
        %379 = vmatprep.subr.mxu0 0.0
        %380 = vmatpush1.msra.mxu0 0.0
        %381 = vmatprep.subr.mxu0 0.0
        %382 = vmatpush1.msra.mxu0 0.0
        %383 = vmatprep.subr.mxu0 0.0
        %384 = vmatpush1.msra.mxu0 0.0
        %385 = vmatprep.subr.mxu0 0.0
        %386 = vmatpush1.msra.mxu0 0.0
        %387 = vmatprep.subr.mxu0 0.0
        %388 = vmatpush1.msra.mxu0 0.0
        %389 = vmatprep.subr.mxu0 0.0
        %390 = vmatpush1.msra.mxu0 0.0
        %391 = vmatprep.subr.mxu0 0.0
        %392 = vmatpush1.msra.mxu0 0.0
        %393 = vmatprep.subr.mxu0 0.0
        %394 = vmatpush1.msra.mxu0 0.0
        %395 = vmatprep.subr.mxu0 0.0
        %396 = vmatpush1.msra.mxu0 0.0
        %397 = vmatprep.subr.mxu0 0.0
        %398 = vmatpush1.msra.mxu0 0.0
        %399 = vmatprep.subr.mxu0 0.0
        %400 = vmatpush1.msra.mxu0 0.0
        %401 = vmatprep.subr.mxu0 0.0
        %402 = vmatpush1.msra.mxu0 0.0
        %403 = vmatprep.mubr.f32.mxu0 0.0
        %404 = vmatmul.mubr.f32.gmra.mrb[0].mxu0 %v261
        %v405 = vpop.f32.mrb[0].mxu0
        %v406 = vadd.f32 %v257, %v405
        %v407 = vpop.f32.mrb[0].mxu0
        %408 = vmatprep.mubr.f32.mxu0 0.0
        %409 = vmatmul.mubr.f32.gmra.mrb[0].mxu0 %v264
        %v410 = vpop.f32.mrb[0].mxu0
        %v411 = vadd.f32 %v257, %v410
        %v412 = vpop.f32.mrb[0].mxu0
        %413 = vmatprep.mubr.f32.mxu0 0.0
        %414 = vmatmul.mubr.f32.gmra.mrb[0].mxu0 %v267
        %v415 = vpop.f32.mrb[0].mxu0
        %v416 = vadd.f32 %v257, %v415
        %v417 = vpop.f32.mrb[0].mxu0
        %418 = vmatprep.mubr.f32.mxu0 0.0
        %419 = vmatmul.mubr.f32.gmra.mrb[0].mxu0 %v270
        %v420 = vpop.f32.mrb[0].mxu0
        %v421 = vadd.f32 %v257, %v420
        %v422 = vpop.f32.mrb[0].mxu0
        %423 = vmatprep.mubr.f32.mxu0 0.0
        %424 = vmatmul.mubr.f32.gmra.mrb[0].mxu0 %v273
        %v425 = vpop.f32.mrb[0].mxu0
        %v426 = vadd.f32 %v257, %v425
        %v427 = vpop.f32.mrb[0].mxu0
        %428 = vmatprep.mubr.f32.mxu0 0.0
        %429 = vmatmul.mubr.f32.gmra.mrb[0].mxu0 %v276
        %v430 = vpop.f32.mrb[0].mxu0
        %v431 = vadd.f32 %v257, %v430
        %v432 = vpop.f32.mrb[0].mxu0
        %433 = vmatprep.mubr.f32.mxu0 0.0
        %434 = vmatmul.mubr.f32.gmra.mrb[0].mxu0 %v279
        %v435 = vpop.f32.mrb[0].mxu0
        %v436 = vadd.f32 %v257, %v435
        %v437 = vpop.f32.mrb[0].mxu0
        %438 = vmatprep.mubr.f32.mxu0 0.0
        %439 = vmatmul.mubr.f32.gmra.mrb[0].mxu0 %v282
        %v440 = vpop.f32.mrb[0].mxu0
        %v441 = vadd.f32 %v257, %v440
        %v442 = vpop.f32.mrb[0].mxu0
        %443 = vmatprep.mubr.f32.mxu0 0.0
        %444 = vmatmul.mubr.f32.gmra.mrb[0].mxu0 %v285
        %v445 = vpop.f32.mrb[0].mxu0
        %v446 = vadd.f32 %v257, %v445
        %v447 = vpop.f32.mrb[0].mxu0
        %448 = vmatprep.mubr.f32.mxu0 0.0
        %449 = vmatmul.mubr.f32.gmra.mrb[0].mxu0 %v288
        %v450 = vpop.f32.mrb[0].mxu0
        %v451 = vadd.f32 %v257, %v450
        %v452 = vpop.f32.mrb[0].mxu0
        %453 = vmatprep.mubr.f32.mxu0 0.0
        %454 = vmatmul.mubr.f32.gmra.mrb[0].mxu0 %v291
        %v455 = vpop.f32.mrb[0].mxu0
        %v456 = vadd.f32 %v257, %v455
        %v457 = vpop.f32.mrb[0].mxu0
        %458 = vmatprep.mubr.f32.mxu0 0.0
        %459 = vmatmul.mubr.f32.gmra.mrb[0].mxu0 %v294
        %v460 = vpop.f32.mrb[0].mxu0
        %v461 = vadd.f32 %v257, %v460
        %v462 = vpop.f32.mrb[0].mxu0
        %463 = vmatprep.mubr.f32.mxu0 0.0
        %464 = vmatmul.mubr.f32.gmra.mrb[0].mxu0 %v297
        %v465 = vpop.f32.mrb[0].mxu0
        %v466 = vadd.f32 %v257, %v465
        %v467 = vpop.f32.mrb[0].mxu0
        %468 = vmatprep.mubr.f32.mxu0 0.0
        %469 = vmatmul.mubr.f32.gmra.mrb[0].mxu0 %v300
        %v470 = vpop.f32.mrb[0].mxu0
        %v471 = vadd.f32 %v257, %v470
        %v472 = vpop.f32.mrb[0].mxu0
        %473 = vmatprep.mubr.f32.mxu0 0.0
        %474 = vmatmul.mubr.f32.gmra.mrb[0].mxu0 %v303
        %v475 = vpop.f32.mrb[0].mxu0
        %v476 = vadd.f32 %v257, %v475
        %v477 = vpop.f32.mrb[0].mxu0
        %478 = vmatprep.mubr.f32.mxu0 0.0
        %479 = vmatmul.mubr.f32.gmra.mrb[0].mxu0 %v306
        %v480 = vpop.f32.mrb[0].mxu0
        %v481 = vadd.f32 %v257, %v480
        %v482 = vpop.f32.mrb[0].mxu0
        %483 = vmatprep.mubr.f32.mxu0 0.0
        %484 = vmatmul.mubr.f32.gmra.mrb[0].mxu0 %v309
        %v485 = vpop.f32.mrb[0].mxu0
        %v486 = vadd.f32 %v257, %v485
        %v487 = vpop.f32.mrb[0].mxu0
        %488 = vmatprep.mubr.f32.mxu0 0.0
        %489 = vmatmul.mubr.f32.gmra.mrb[0].mxu0 %v312
        %v490 = vpop.f32.mrb[0].mxu0
        %v491 = vadd.f32 %v257, %v490
        %v492 = vpop.f32.mrb[0].mxu0
        %493 = vmatprep.mubr.f32.mxu0 0.0
        %494 = vmatmul.mubr.f32.gmra.mrb[0].mxu0 %v315
        %v495 = vpop.f32.mrb[0].mxu0
        %v496 = vadd.f32 %v257, %v495
        %v497 = vpop.f32.mrb[0].mxu0
        %498 = vmatprep.mubr.f32.mxu0 0.0
        %499 = vmatmul.mubr.f32.gmra.mrb[0].mxu0 %v318
        %v500 = vpop.f32.mrb[0].mxu0
        %v501 = vadd.f32 %v257, %v500
        %v502 = vpop.f32.mrb[0].mxu0
        %503 = vmatprep.mubr.f32.mxu0 0.0
        %504 = vmatmul.mubr.f32.gmra.mrb[0].mxu0 %v321
        %v505 = vpop.f32.mrb[0].mxu0
        %v506 = vadd.f32 %v257, %v505
        %v507 = vpop.f32.mrb[0].mxu0
        %508 = vmatprep.mubr.f32.mxu0 0.0
        %509 = vmatmul.mubr.f32.gmra.mrb[0].mxu0 %v324
        %v510 = vpop.f32.mrb[0].mxu0
        %v511 = vadd.f32 %v257, %v510
        %v512 = vpop.f32.mrb[0].mxu0
        %513 = vmatprep.mubr.f32.mxu0 0.0
        %514 = vmatmul.mubr.f32.gmra.mrb[0].mxu0 %v327
        %v515 = vpop.f32.mrb[0].mxu0
        %v516 = vadd.f32 %v257, %v515
        %v517 = vpop.f32.mrb[0].mxu0
        %518 = vmatprep.mubr.f32.mxu0 0.0
        %519 = vmatmul.mubr.f32.gmra.mrb[0].mxu0 %v330
        %v520 = vpop.f32.mrb[0].mxu0
        %v521 = vadd.f32 %v257, %v520
        %v522 = vpop.f32.mrb[0].mxu0
        %523 = vmatprep.mubr.f32.mxu0 0.0
        %524 = vmatmul.mubr.f32.gmra.mrb[0].mxu0 %v333
        %v525 = vpop.f32.mrb[0].mxu0
        %v526 = vadd.f32 %v257, %v525
        %v527 = vpop.f32.mrb[0].mxu0
        %528 = vdwg.mxu0
        %v529 = vmax.f32 %v406, 0.0
        %v530 = vmax.f32 %v411, 0.0
        %v531 = vmax.f32 %v416, 0.0
        %v532 = vmax.f32 %v421, 0.0
        %v533 = vmax.f32 %v426, 0.0
        %v534 = vmax.f32 %v431, 0.0
        %v535 = vmax.f32 %v436, 0.0
        %v536 = vmax.f32 %v441, 0.0
        %v537 = vmax.f32 %v446, 0.0
        %v538 = vmax.f32 %v451, 0.0
        %v539 = vmax.f32 %v456, 0.0
        %v540 = vmax.f32 %v461, 0.0
        %v541 = vmax.f32 %v466, 0.0
        %v542 = vmax.f32 %v471, 0.0
        %v543 = vmax.f32 %v476, 0.0
        %v544 = vmax.f32 %v481, 0.0
        %v545 = vmax.f32 %v486, 0.0
        %v546 = vmax.f32 %v491, 0.0
        %v547 = vmax.f32 %v496, 0.0
        %v548 = vmax.f32 %v501, 0.0
        %v549 = vmax.f32 %v506, 0.0
        %v550 = vmax.f32 %v511, 0.0
        %v551 = vmax.f32 %v516, 0.0
        %v552 = vmax.f32 %v521, 0.0
        %v553 = vmax.f32 %v526, 0.0
        %v554 = vlaneseq
        %v555 = vand.u32 %v554, 127
        %v556 = vld [vmem:[%s4] sm:$0x1]
        %v557 = vld [vmem:[%s3] sm:$0xff]
        %v558 = vld [vmem:[%s3 + $0x8] sm:$0xff]
        %v559 = vld [vmem:[%s3 + $0x10] sm:$0xff]
        %v560 = vld [vmem:[%s3 + $0x18] sm:$0xff]
        %v561 = vld [vmem:[%s3 + $0x20] sm:$0xff]
        %v562 = vld [vmem:[%s3 + $0x28] sm:$0xff]
        %v563 = vld [vmem:[%s3 + $0x30] sm:$0xff]
        %v564 = vld [vmem:[%s3 + $0x38] sm:$0xff]
        %v565 = vld [vmem:[%s3 + $0x40] sm:$0xff]
        %v566 = vld [vmem:[%s3 + $0x48] sm:$0xff]
        %v567 = vld [vmem:[%s3 + $0x50] sm:$0xff]
        %v568 = vld [vmem:[%s3 + $0x58] sm:$0xff]
        %v569 = vld [vmem:[%s3 + $0x60] sm:$0xff]
        %v570 = vld [vmem:[%s3 + $0x68] sm:$0xff]
        %v571 = vld [vmem:[%s3 + $0x70] sm:$0xff]
        %v572 = vld [vmem:[%s3 + $0x78] sm:$0xff]
        %v573 = vld [vmem:[%s3 + $0x80] sm:$0xff]
        %v574 = vld [vmem:[%s3 + $0x88] sm:$0xff]
        %v575 = vld [vmem:[%s3 + $0x90] sm:$0xff]
        %v576 = vld [vmem:[%s3 + $0x98] sm:$0xff]
        %v577 = vld [vmem:[%s3 + $0xa0] sm:$0xff]
        %v578 = vld [vmem:[%s3 + $0xa8] sm:$0xff]
        %v579 = vld [vmem:[%s3 + $0xb0] sm:$0xff]
        %v580 = vld [vmem:[%s3 + $0xb8] sm:$0xff]
        %v581 = vld [vmem:[%s3 + $0xc0] sm:$0xf]
        %v582 = vmul.f32 %v529, %v557
        %v583 = vmul.f32 %v530, %v558
        %v584 = vmul.f32 %v531, %v559
        %v585 = vmul.f32 %v532, %v560
        %v586 = vmul.f32 %v533, %v561
        %v587 = vmul.f32 %v534, %v562
        %v588 = vmul.f32 %v535, %v563
        %v589 = vmul.f32 %v536, %v564
        %v590 = vmul.f32 %v537, %v565
        %v591 = vmul.f32 %v538, %v566
        %v592 = vmul.f32 %v539, %v567
        %v593 = vmul.f32 %v540, %v568
        %v594 = vmul.f32 %v541, %v569
        %v595 = vmul.f32 %v542, %v570
        %v596 = vmul.f32 %v543, %v571
        %v597 = vmul.f32 %v544, %v572
        %v598 = vmul.f32 %v545, %v573
        %v599 = vmul.f32 %v546, %v574
        %v600 = vmul.f32 %v547, %v575
        %v601 = vmul.f32 %v548, %v576
        %v602 = vmul.f32 %v549, %v577
        %v603 = vmul.f32 %v550, %v578
        %v604 = vmul.f32 %v551, %v579
        %v605 = vmul.f32 %v552, %v580
        %v606 = vmul.f32 %v553, %v581
        %vm607 = vcmask 130048
        %v608 = vsel %vm607, %v582, 0.0
        %v609 = vsel %vm607, %v583, 0.0
        %v610 = vadd.f32 %v608, %v609
        %v611 = vsel %vm607, %v584, 0.0
        %v612 = vadd.f32 %v610, %v611
        %v613 = vsel %vm607, %v585, 0.0
        %v614 = vadd.f32 %v612, %v613
        %v615 = vsel %vm607, %v586, 0.0
        %v616 = vadd.f32 %v614, %v615
        %v617 = vsel %vm607, %v587, 0.0
        %v618 = vadd.f32 %v616, %v617
        %v619 = vsel %vm607, %v588, 0.0
        %v620 = vadd.f32 %v618, %v619
        %v621 = vsel %vm607, %v589, 0.0
        %v622 = vadd.f32 %v620, %v621
        %v623 = vsel %vm607, %v590, 0.0
        %v624 = vadd.f32 %v622, %v623
        %v625 = vsel %vm607, %v591, 0.0
        %v626 = vadd.f32 %v624, %v625
        %v627 = vsel %vm607, %v592, 0.0
        %v628 = vadd.f32 %v626, %v627
        %v629 = vsel %vm607, %v593, 0.0
        %v630 = vadd.f32 %v628, %v629
        %v631 = vsel %vm607, %v594, 0.0
        %v632 = vadd.f32 %v630, %v631
        %v633 = vsel %vm607, %v595, 0.0
        %v634 = vadd.f32 %v632, %v633
        %v635 = vsel %vm607, %v596, 0.0
        %v636 = vadd.f32 %v634, %v635
        %v637 = vsel %vm607, %v597, 0.0
        %v638 = vadd.f32 %v636, %v637
        %v639 = vsel %vm607, %v598, 0.0
        %v640 = vadd.f32 %v638, %v639
        %v641 = vsel %vm607, %v599, 0.0
        %v642 = vadd.f32 %v640, %v641
        %v643 = vsel %vm607, %v600, 0.0
        %v644 = vadd.f32 %v642, %v643
        %v645 = vsel %vm607, %v601, 0.0
        %v646 = vadd.f32 %v644, %v645
        %v647 = vsel %vm607, %v602, 0.0
        %v648 = vadd.f32 %v646, %v647
        %v649 = vsel %vm607, %v603, 0.0
        %v650 = vadd.f32 %v648, %v649
        %v651 = vsel %vm607, %v604, 0.0
        %v652 = vadd.f32 %v650, %v651
        %v653 = vsel %vm607, %v605, 0.0
        %v654 = vadd.f32 %v652, %v653
        %vm655 = vcmask 125952
        %v656 = vsel %vm655, %v606, 0.0
        %v657 = vadd.f32 %v654, %v656
        %v658 = vrot.slane %v657, 4
        %v659 = vadd.f32 %v657, %v658
        %v660 = vrot.slane %v659, 2
        %v661 = vadd.f32 %v659, %v660
        %v662 = vrot.slane %v661, 1
        %v663 = vadd.f32 %v661, %v662
        %v664 = vsel %vm607, %v663, 0.0
        %665 = vadd.xlane.f32.xlu0 %v664
        %v666 = vpop.xlane.xlu0 %665
        %vm667 = vcmp.eq.s32.totalorder %v555, 0
        %v668 = vsel %vm667, 1, 0
        %v669 = vcvt.s32.f32 %v668
        %v670 = vmul.f32 %v666, %v669
        %v671 = vadd.f32 %v556, %v670
        %s672 = scalar_lea.vmem %s3, 200
        %v673 = vld [vmem:[%s672] sm:$0xff]
        %v674 = vld [vmem:[%s672 + $0x8] sm:$0xff]
        %v675 = vld [vmem:[%s672 + $0x10] sm:$0xff]
        %v676 = vld [vmem:[%s672 + $0x18] sm:$0xff]
        %v677 = vld [vmem:[%s672 + $0x20] sm:$0xff]
        %v678 = vld [vmem:[%s672 + $0x28] sm:$0xff]
        %v679 = vld [vmem:[%s672 + $0x30] sm:$0xff]
        %v680 = vld [vmem:[%s672 + $0x38] sm:$0xff]
        %v681 = vld [vmem:[%s672 + $0x40] sm:$0xff]
        %v682 = vld [vmem:[%s672 + $0x48] sm:$0xff]
        %v683 = vld [vmem:[%s672 + $0x50] sm:$0xff]
        %v684 = vld [vmem:[%s672 + $0x58] sm:$0xff]
        %v685 = vld [vmem:[%s672 + $0x60] sm:$0xff]
        %v686 = vld [vmem:[%s672 + $0x68] sm:$0xff]
        %v687 = vld [vmem:[%s672 + $0x70] sm:$0xff]
        %v688 = vld [vmem:[%s672 + $0x78] sm:$0xff]
        %v689 = vld [vmem:[%s672 + $0x80] sm:$0xff]
        %v690 = vld [vmem:[%s672 + $0x88] sm:$0xff]
        %v691 = vld [vmem:[%s672 + $0x90] sm:$0xff]
        %v692 = vld [vmem:[%s672 + $0x98] sm:$0xff]
        %v693 = vld [vmem:[%s672 + $0xa0] sm:$0xff]
        %v694 = vld [vmem:[%s672 + $0xa8] sm:$0xff]
        %v695 = vld [vmem:[%s672 + $0xb0] sm:$0xff]
        %v696 = vld [vmem:[%s672 + $0xb8] sm:$0xff]
        %v697 = vld [vmem:[%s672 + $0xc0] sm:$0xf]
        %v698 = vmul.f32 %v529, %v673
        %v699 = vmul.f32 %v530, %v674
        %v700 = vmul.f32 %v531, %v675
        %v701 = vmul.f32 %v532, %v676
        %v702 = vmul.f32 %v533, %v677
        %v703 = vmul.f32 %v534, %v678
        %v704 = vmul.f32 %v535, %v679
        %v705 = vmul.f32 %v536, %v680
        %v706 = vmul.f32 %v537, %v681
        %v707 = vmul.f32 %v538, %v682
        %v708 = vmul.f32 %v539, %v683
        %v709 = vmul.f32 %v540, %v684
        %v710 = vmul.f32 %v541, %v685
        %v711 = vmul.f32 %v542, %v686
        %v712 = vmul.f32 %v543, %v687
        %v713 = vmul.f32 %v544, %v688
        %v714 = vmul.f32 %v545, %v689
        %v715 = vmul.f32 %v546, %v690
        %v716 = vmul.f32 %v547, %v691
        %v717 = vmul.f32 %v548, %v692
        %v718 = vmul.f32 %v549, %v693
        %v719 = vmul.f32 %v550, %v694
        %v720 = vmul.f32 %v551, %v695
        %v721 = vmul.f32 %v552, %v696
        %v722 = vmul.f32 %v553, %v697
        %v723 = vsel %vm607, %v698, 0.0
        %v724 = vsel %vm607, %v699, 0.0
        %v725 = vadd.f32 %v723, %v724
        %v726 = vsel %vm607, %v700, 0.0
        %v727 = vadd.f32 %v725, %v726
        %v728 = vsel %vm607, %v701, 0.0
        %v729 = vadd.f32 %v727, %v728
        %v730 = vsel %vm607, %v702, 0.0
        %v731 = vadd.f32 %v729, %v730
        %v732 = vsel %vm607, %v703, 0.0
        %v733 = vadd.f32 %v731, %v732
        %v734 = vsel %vm607, %v704, 0.0
        %v735 = vadd.f32 %v733, %v734
        %v736 = vsel %vm607, %v705, 0.0
        %v737 = vadd.f32 %v735, %v736
        %v738 = vsel %vm607, %v706, 0.0
        %v739 = vadd.f32 %v737, %v738
        %v740 = vsel %vm607, %v707, 0.0
        %v741 = vadd.f32 %v739, %v740
        %v742 = vsel %vm607, %v708, 0.0
        %v743 = vadd.f32 %v741, %v742
        %v744 = vsel %vm607, %v709, 0.0
        %v745 = vadd.f32 %v743, %v744
        %v746 = vsel %vm607, %v710, 0.0
        %v747 = vadd.f32 %v745, %v746
        %v748 = vsel %vm607, %v711, 0.0
        %v749 = vadd.f32 %v747, %v748
        %v750 = vsel %vm607, %v712, 0.0
        %v751 = vadd.f32 %v749, %v750
        %v752 = vsel %vm607, %v713, 0.0
        %v753 = vadd.f32 %v751, %v752
        %v754 = vsel %vm607, %v714, 0.0
        %v755 = vadd.f32 %v753, %v754
        %v756 = vsel %vm607, %v715, 0.0
        %v757 = vadd.f32 %v755, %v756
        %v758 = vsel %vm607, %v716, 0.0
        %v759 = vadd.f32 %v757, %v758
        %v760 = vsel %vm607, %v717, 0.0
        %v761 = vadd.f32 %v759, %v760
        %v762 = vsel %vm607, %v718, 0.0
        %v763 = vadd.f32 %v761, %v762
        %v764 = vsel %vm607, %v719, 0.0
        %v765 = vadd.f32 %v763, %v764
        %v766 = vsel %vm607, %v720, 0.0
        %v767 = vadd.f32 %v765, %v766
        %v768 = vsel %vm607, %v721, 0.0
        %v769 = vadd.f32 %v767, %v768
        %v770 = vsel %vm655, %v722, 0.0
        %v771 = vadd.f32 %v769, %v770
        %v772 = vrot.slane %v771, 4
        %v773 = vadd.f32 %v771, %v772
        %v774 = vrot.slane %v773, 2
        %v775 = vadd.f32 %v773, %v774
        %v776 = vrot.slane %v775, 1
        %v777 = vadd.f32 %v775, %v776
        %v778 = vsel %vm607, %v777, 0.0
        %779 = vadd.xlane.f32.xlu0 %v778
        %v780 = vpop.xlane.xlu0 %779
        %vm781 = vcmp.eq.s32.totalorder %v555, 1
        %v782 = vsel %vm781, 1, 0
        %v783 = vcvt.s32.f32 %v782
        %v784 = vmul.f32 %v780, %v783
        %v785 = vadd.f32 %v671, %v784
        %s786 = scalar_lea.vmem %s3, 400
        %v787 = vld [vmem:[%s786] sm:$0xff]
        %v788 = vld [vmem:[%s786 + $0x8] sm:$0xff]
        %v789 = vld [vmem:[%s786 + $0x10] sm:$0xff]
        %v790 = vld [vmem:[%s786 + $0x18] sm:$0xff]
        %v791 = vld [vmem:[%s786 + $0x20] sm:$0xff]
        %v792 = vld [vmem:[%s786 + $0x28] sm:$0xff]
        %v793 = vld [vmem:[%s786 + $0x30] sm:$0xff]
        %v794 = vld [vmem:[%s786 + $0x38] sm:$0xff]
        %v795 = vld [vmem:[%s786 + $0x40] sm:$0xff]
        %v796 = vld [vmem:[%s786 + $0x48] sm:$0xff]
        %v797 = vld [vmem:[%s786 + $0x50] sm:$0xff]
        %v798 = vld [vmem:[%s786 + $0x58] sm:$0xff]
        %v799 = vld [vmem:[%s786 + $0x60] sm:$0xff]
        %v800 = vld [vmem:[%s786 + $0x68] sm:$0xff]
        %v801 = vld [vmem:[%s786 + $0x70] sm:$0xff]
        %v802 = vld [vmem:[%s786 + $0x78] sm:$0xff]
        %v803 = vld [vmem:[%s786 + $0x80] sm:$0xff]
        %v804 = vld [vmem:[%s786 + $0x88] sm:$0xff]
        %v805 = vld [vmem:[%s786 + $0x90] sm:$0xff]
        %v806 = vld [vmem:[%s786 + $0x98] sm:$0xff]
        %v807 = vld [vmem:[%s786 + $0xa0] sm:$0xff]
        %v808 = vld [vmem:[%s786 + $0xa8] sm:$0xff]
        %v809 = vld [vmem:[%s786 + $0xb0] sm:$0xff]
        %v810 = vld [vmem:[%s786 + $0xb8] sm:$0xff]
        %v811 = vld [vmem:[%s786 + $0xc0] sm:$0xf]
        %v812 = vmul.f32 %v529, %v787
        %v813 = vmul.f32 %v530, %v788
        %v814 = vmul.f32 %v531, %v789
        %v815 = vmul.f32 %v532, %v790
        %v816 = vmul.f32 %v533, %v791
        %v817 = vmul.f32 %v534, %v792
        %v818 = vmul.f32 %v535, %v793
        %v819 = vmul.f32 %v536, %v794
        %v820 = vmul.f32 %v537, %v795
        %v821 = vmul.f32 %v538, %v796
        %v822 = vmul.f32 %v539, %v797
        %v823 = vmul.f32 %v540, %v798
        %v824 = vmul.f32 %v541, %v799
        %v825 = vmul.f32 %v542, %v800
        %v826 = vmul.f32 %v543, %v801
        %v827 = vmul.f32 %v544, %v802
        %v828 = vmul.f32 %v545, %v803
        %v829 = vmul.f32 %v546, %v804
        %v830 = vmul.f32 %v547, %v805
        %v831 = vmul.f32 %v548, %v806
        %v832 = vmul.f32 %v549, %v807
        %v833 = vmul.f32 %v550, %v808
        %v834 = vmul.f32 %v551, %v809
        %v835 = vmul.f32 %v552, %v810
        %v836 = vmul.f32 %v553, %v811
        %v837 = vsel %vm607, %v812, 0.0
        %v838 = vsel %vm607, %v813, 0.0
        %v839 = vadd.f32 %v837, %v838
        %v840 = vsel %vm607, %v814, 0.0
        %v841 = vadd.f32 %v839, %v840
        %v842 = vsel %vm607, %v815, 0.0
        %v843 = vadd.f32 %v841, %v842
        %v844 = vsel %vm607, %v816, 0.0
        %v845 = vadd.f32 %v843, %v844
        %v846 = vsel %vm607, %v817, 0.0
        %v847 = vadd.f32 %v845, %v846
        %v848 = vsel %vm607, %v818, 0.0
        %v849 = vadd.f32 %v847, %v848
        %v850 = vsel %vm607, %v819, 0.0
        %v851 = vadd.f32 %v849, %v850
        %v852 = vsel %vm607, %v820, 0.0
        %v853 = vadd.f32 %v851, %v852
        %v854 = vsel %vm607, %v821, 0.0
        %v855 = vadd.f32 %v853, %v854
        %v856 = vsel %vm607, %v822, 0.0
        %v857 = vadd.f32 %v855, %v856
        %v858 = vsel %vm607, %v823, 0.0
        %v859 = vadd.f32 %v857, %v858
        %v860 = vsel %vm607, %v824, 0.0
        %v861 = vadd.f32 %v859, %v860
        %v862 = vsel %vm607, %v825, 0.0
        %v863 = vadd.f32 %v861, %v862
        %v864 = vsel %vm607, %v826, 0.0
        %v865 = vadd.f32 %v863, %v864
        %v866 = vsel %vm607, %v827, 0.0
        %v867 = vadd.f32 %v865, %v866
        %v868 = vsel %vm607, %v828, 0.0
        %v869 = vadd.f32 %v867, %v868
        %v870 = vsel %vm607, %v829, 0.0
        %v871 = vadd.f32 %v869, %v870
        %v872 = vsel %vm607, %v830, 0.0
        %v873 = vadd.f32 %v871, %v872
        %v874 = vsel %vm607, %v831, 0.0
        %v875 = vadd.f32 %v873, %v874
        %v876 = vsel %vm607, %v832, 0.0
        %v877 = vadd.f32 %v875, %v876
        %v878 = vsel %vm607, %v833, 0.0
        %v879 = vadd.f32 %v877, %v878
        %v880 = vsel %vm607, %v834, 0.0
        %v881 = vadd.f32 %v879, %v880
        %v882 = vsel %vm607, %v835, 0.0
        %v883 = vadd.f32 %v881, %v882
        %v884 = vsel %vm655, %v836, 0.0
        %v885 = vadd.f32 %v883, %v884
        %v886 = vrot.slane %v885, 4
        %v887 = vadd.f32 %v885, %v886
        %v888 = vrot.slane %v887, 2
        %v889 = vadd.f32 %v887, %v888
        %v890 = vrot.slane %v889, 1
        %v891 = vadd.f32 %v889, %v890
        %v892 = vsel %vm607, %v891, 0.0
        %893 = vadd.xlane.f32.xlu0 %v892
        %v894 = vpop.xlane.xlu0 %893
        %vm895 = vcmp.eq.s32.totalorder %v555, 2
        %v896 = vsel %vm895, 1, 0
        %v897 = vcvt.s32.f32 %v896
        %v898 = vmul.f32 %v894, %v897
        %v899 = vadd.f32 %v785, %v898
        %s900 = scalar_lea.vmem %s3, 600
        %v901 = vld [vmem:[%s900] sm:$0xff]
        %v902 = vld [vmem:[%s900 + $0x8] sm:$0xff]
        %v903 = vld [vmem:[%s900 + $0x10] sm:$0xff]
        %v904 = vld [vmem:[%s900 + $0x18] sm:$0xff]
        %v905 = vld [vmem:[%s900 + $0x20] sm:$0xff]
        %v906 = vld [vmem:[%s900 + $0x28] sm:$0xff]
        %v907 = vld [vmem:[%s900 + $0x30] sm:$0xff]
        %v908 = vld [vmem:[%s900 + $0x38] sm:$0xff]
        %v909 = vld [vmem:[%s900 + $0x40] sm:$0xff]
        %v910 = vld [vmem:[%s900 + $0x48] sm:$0xff]
        %v911 = vld [vmem:[%s900 + $0x50] sm:$0xff]
        %v912 = vld [vmem:[%s900 + $0x58] sm:$0xff]
        %v913 = vld [vmem:[%s900 + $0x60] sm:$0xff]
        %v914 = vld [vmem:[%s900 + $0x68] sm:$0xff]
        %v915 = vld [vmem:[%s900 + $0x70] sm:$0xff]
        %v916 = vld [vmem:[%s900 + $0x78] sm:$0xff]
        %v917 = vld [vmem:[%s900 + $0x80] sm:$0xff]
        %v918 = vld [vmem:[%s900 + $0x88] sm:$0xff]
        %v919 = vld [vmem:[%s900 + $0x90] sm:$0xff]
        %v920 = vld [vmem:[%s900 + $0x98] sm:$0xff]
        %v921 = vld [vmem:[%s900 + $0xa0] sm:$0xff]
        %v922 = vld [vmem:[%s900 + $0xa8] sm:$0xff]
        %v923 = vld [vmem:[%s900 + $0xb0] sm:$0xff]
        %v924 = vld [vmem:[%s900 + $0xb8] sm:$0xff]
        %v925 = vld [vmem:[%s900 + $0xc0] sm:$0xf]
        %v926 = vmul.f32 %v529, %v901
        %v927 = vmul.f32 %v530, %v902
        %v928 = vmul.f32 %v531, %v903
        %v929 = vmul.f32 %v532, %v904
        %v930 = vmul.f32 %v533, %v905
        %v931 = vmul.f32 %v534, %v906
        %v932 = vmul.f32 %v535, %v907
        %v933 = vmul.f32 %v536, %v908
        %v934 = vmul.f32 %v537, %v909
        %v935 = vmul.f32 %v538, %v910
        %v936 = vmul.f32 %v539, %v911
        %v937 = vmul.f32 %v540, %v912
        %v938 = vmul.f32 %v541, %v913
        %v939 = vmul.f32 %v542, %v914
        %v940 = vmul.f32 %v543, %v915
        %v941 = vmul.f32 %v544, %v916
        %v942 = vmul.f32 %v545, %v917
        %v943 = vmul.f32 %v546, %v918
        %v944 = vmul.f32 %v547, %v919
        %v945 = vmul.f32 %v548, %v920
        %v946 = vmul.f32 %v549, %v921
        %v947 = vmul.f32 %v550, %v922
        %v948 = vmul.f32 %v551, %v923
        %v949 = vmul.f32 %v552, %v924
        %v950 = vmul.f32 %v553, %v925
        %v951 = vsel %vm607, %v926, 0.0
        %v952 = vsel %vm607, %v927, 0.0
        %v953 = vadd.f32 %v951, %v952
        %v954 = vsel %vm607, %v928, 0.0
        %v955 = vadd.f32 %v953, %v954
        %v956 = vsel %vm607, %v929, 0.0
        %v957 = vadd.f32 %v955, %v956
        %v958 = vsel %vm607, %v930, 0.0
        %v959 = vadd.f32 %v957, %v958
        %v960 = vsel %vm607, %v931, 0.0
        %v961 = vadd.f32 %v959, %v960
        %v962 = vsel %vm607, %v932, 0.0
        %v963 = vadd.f32 %v961, %v962
        %v964 = vsel %vm607, %v933, 0.0
        %v965 = vadd.f32 %v963, %v964
        %v966 = vsel %vm607, %v934, 0.0
        %v967 = vadd.f32 %v965, %v966
        %v968 = vsel %vm607, %v935, 0.0
        %v969 = vadd.f32 %v967, %v968
        %v970 = vsel %vm607, %v936, 0.0
        %v971 = vadd.f32 %v969, %v970
        %v972 = vsel %vm607, %v937, 0.0
        %v973 = vadd.f32 %v971, %v972
        %v974 = vsel %vm607, %v938, 0.0
        %v975 = vadd.f32 %v973, %v974
        %v976 = vsel %vm607, %v939, 0.0
        %v977 = vadd.f32 %v975, %v976
        %v978 = vsel %vm607, %v940, 0.0
        %v979 = vadd.f32 %v977, %v978
        %v980 = vsel %vm607, %v941, 0.0
        %v981 = vadd.f32 %v979, %v980
        %v982 = vsel %vm607, %v942, 0.0
        %v983 = vadd.f32 %v981, %v982
        %v984 = vsel %vm607, %v943, 0.0
        %v985 = vadd.f32 %v983, %v984
        %v986 = vsel %vm607, %v944, 0.0
        %v987 = vadd.f32 %v985, %v986
        %v988 = vsel %vm607, %v945, 0.0
        %v989 = vadd.f32 %v987, %v988
        %v990 = vsel %vm607, %v946, 0.0
        %v991 = vadd.f32 %v989, %v990
        %v992 = vsel %vm607, %v947, 0.0
        %v993 = vadd.f32 %v991, %v992
        %v994 = vsel %vm607, %v948, 0.0
        %v995 = vadd.f32 %v993, %v994
        %v996 = vsel %vm607, %v949, 0.0
        %v997 = vadd.f32 %v995, %v996
        %v998 = vsel %vm655, %v950, 0.0
        %v999 = vadd.f32 %v997, %v998
        %v1000 = vrot.slane %v999, 4
        %v1001 = vadd.f32 %v999, %v1000
        %v1002 = vrot.slane %v1001, 2
        %v1003 = vadd.f32 %v1001, %v1002
        %v1004 = vrot.slane %v1003, 1
        %v1005 = vadd.f32 %v1003, %v1004
        %v1006 = vsel %vm607, %v1005, 0.0
        %1007 = vadd.xlane.f32.xlu0 %v1006
        %v1008 = vpop.xlane.xlu0 %1007
        %vm1009 = vcmp.eq.s32.totalorder %v555, 3
        %v1010 = vsel %vm1009, 1, 0
        %v1011 = vcvt.s32.f32 %v1010
        %v1012 = vmul.f32 %v1008, %v1011
        %v1013 = vadd.f32 %v899, %v1012
        %s1014 = scalar_lea.vmem %s3, 800
        %v1015 = vld [vmem:[%s1014] sm:$0xff]
        %v1016 = vld [vmem:[%s1014 + $0x8] sm:$0xff]
        %v1017 = vld [vmem:[%s1014 + $0x10] sm:$0xff]
        %v1018 = vld [vmem:[%s1014 + $0x18] sm:$0xff]
        %v1019 = vld [vmem:[%s1014 + $0x20] sm:$0xff]
        %v1020 = vld [vmem:[%s1014 + $0x28] sm:$0xff]
        %v1021 = vld [vmem:[%s1014 + $0x30] sm:$0xff]
        %v1022 = vld [vmem:[%s1014 + $0x38] sm:$0xff]
        %v1023 = vld [vmem:[%s1014 + $0x40] sm:$0xff]
        %v1024 = vld [vmem:[%s1014 + $0x48] sm:$0xff]
        %v1025 = vld [vmem:[%s1014 + $0x50] sm:$0xff]
        %v1026 = vld [vmem:[%s1014 + $0x58] sm:$0xff]
        %v1027 = vld [vmem:[%s1014 + $0x60] sm:$0xff]
        %v1028 = vld [vmem:[%s1014 + $0x68] sm:$0xff]
        %v1029 = vld [vmem:[%s1014 + $0x70] sm:$0xff]
        %v1030 = vld [vmem:[%s1014 + $0x78] sm:$0xff]
        %v1031 = vld [vmem:[%s1014 + $0x80] sm:$0xff]
        %v1032 = vld [vmem:[%s1014 + $0x88] sm:$0xff]
        %v1033 = vld [vmem:[%s1014 + $0x90] sm:$0xff]
        %v1034 = vld [vmem:[%s1014 + $0x98] sm:$0xff]
        %v1035 = vld [vmem:[%s1014 + $0xa0] sm:$0xff]
        %v1036 = vld [vmem:[%s1014 + $0xa8] sm:$0xff]
        %v1037 = vld [vmem:[%s1014 + $0xb0] sm:$0xff]
        %v1038 = vld [vmem:[%s1014 + $0xb8] sm:$0xff]
        %v1039 = vld [vmem:[%s1014 + $0xc0] sm:$0xf]
        %v1040 = vmul.f32 %v529, %v1015
        %v1041 = vmul.f32 %v530, %v1016
        %v1042 = vmul.f32 %v531, %v1017
        %v1043 = vmul.f32 %v532, %v1018
        %v1044 = vmul.f32 %v533, %v1019
        %v1045 = vmul.f32 %v534, %v1020
        %v1046 = vmul.f32 %v535, %v1021
        %v1047 = vmul.f32 %v536, %v1022
        %v1048 = vmul.f32 %v537, %v1023
        %v1049 = vmul.f32 %v538, %v1024
        %v1050 = vmul.f32 %v539, %v1025
        %v1051 = vmul.f32 %v540, %v1026
        %v1052 = vmul.f32 %v541, %v1027
        %v1053 = vmul.f32 %v542, %v1028
        %v1054 = vmul.f32 %v543, %v1029
        %v1055 = vmul.f32 %v544, %v1030
        %v1056 = vmul.f32 %v545, %v1031
        %v1057 = vmul.f32 %v546, %v1032
        %v1058 = vmul.f32 %v547, %v1033
        %v1059 = vmul.f32 %v548, %v1034
        %v1060 = vmul.f32 %v549, %v1035
        %v1061 = vmul.f32 %v550, %v1036
        %v1062 = vmul.f32 %v551, %v1037
        %v1063 = vmul.f32 %v552, %v1038
        %v1064 = vmul.f32 %v553, %v1039
        %v1065 = vsel %vm607, %v1040, 0.0
        %v1066 = vsel %vm607, %v1041, 0.0
        %v1067 = vadd.f32 %v1065, %v1066
        %v1068 = vsel %vm607, %v1042, 0.0
        %v1069 = vadd.f32 %v1067, %v1068
        %v1070 = vsel %vm607, %v1043, 0.0
        %v1071 = vadd.f32 %v1069, %v1070
        %v1072 = vsel %vm607, %v1044, 0.0
        %v1073 = vadd.f32 %v1071, %v1072
        %v1074 = vsel %vm607, %v1045, 0.0
        %v1075 = vadd.f32 %v1073, %v1074
        %v1076 = vsel %vm607, %v1046, 0.0
        %v1077 = vadd.f32 %v1075, %v1076
        %v1078 = vsel %vm607, %v1047, 0.0
        %v1079 = vadd.f32 %v1077, %v1078
        %v1080 = vsel %vm607, %v1048, 0.0
        %v1081 = vadd.f32 %v1079, %v1080
        %v1082 = vsel %vm607, %v1049, 0.0
        %v1083 = vadd.f32 %v1081, %v1082
        %v1084 = vsel %vm607, %v1050, 0.0
        %v1085 = vadd.f32 %v1083, %v1084
        %v1086 = vsel %vm607, %v1051, 0.0
        %v1087 = vadd.f32 %v1085, %v1086
        %v1088 = vsel %vm607, %v1052, 0.0
        %v1089 = vadd.f32 %v1087, %v1088
        %v1090 = vsel %vm607, %v1053, 0.0
        %v1091 = vadd.f32 %v1089, %v1090
        %v1092 = vsel %vm607, %v1054, 0.0
        %v1093 = vadd.f32 %v1091, %v1092
        %v1094 = vsel %vm607, %v1055, 0.0
        %v1095 = vadd.f32 %v1093, %v1094
        %v1096 = vsel %vm607, %v1056, 0.0
        %v1097 = vadd.f32 %v1095, %v1096
        %v1098 = vsel %vm607, %v1057, 0.0
        %v1099 = vadd.f32 %v1097, %v1098
        %v1100 = vsel %vm607, %v1058, 0.0
        %v1101 = vadd.f32 %v1099, %v1100
        %v1102 = vsel %vm607, %v1059, 0.0
        %v1103 = vadd.f32 %v1101, %v1102
        %v1104 = vsel %vm607, %v1060, 0.0
        %v1105 = vadd.f32 %v1103, %v1104
        %v1106 = vsel %vm607, %v1061, 0.0
        %v1107 = vadd.f32 %v1105, %v1106
        %v1108 = vsel %vm607, %v1062, 0.0
        %v1109 = vadd.f32 %v1107, %v1108
        %v1110 = vsel %vm607, %v1063, 0.0
        %v1111 = vadd.f32 %v1109, %v1110
        %v1112 = vsel %vm655, %v1064, 0.0
        %v1113 = vadd.f32 %v1111, %v1112
        %v1114 = vrot.slane %v1113, 4
        %v1115 = vadd.f32 %v1113, %v1114
        %v1116 = vrot.slane %v1115, 2
        %v1117 = vadd.f32 %v1115, %v1116
        %v1118 = vrot.slane %v1117, 1
        %v1119 = vadd.f32 %v1117, %v1118
        %v1120 = vsel %vm607, %v1119, 0.0
        %1121 = vadd.xlane.f32.xlu0 %v1120
        %v1122 = vpop.xlane.xlu0 %1121
        %vm1123 = vcmp.eq.s32.totalorder %v555, 4
        %v1124 = vsel %vm1123, 1, 0
        %v1125 = vcvt.s32.f32 %v1124
        %v1126 = vmul.f32 %v1122, %v1125
        %v1127 = vadd.f32 %v1013, %v1126
        %vm1128 = vcmask 32768
        %v1129 = vsel %vm1128, %v1127, -inf
        %1130 = vmax.xlane.f32.xlu0 %v1129
        %v1131 = vpop.xlane.xlu0 %1130
        %v1132 = vsub.f32 %v1127, %v1131
        %v1133 = vmul.f32 %v1132, 1.442695
        %v1134 = vpow.pop %v1133
        %v1135 = vsel %vm1128, %v1134, 0.0
        %1136 = vadd.xlane.f32.xlu0 %v1135
        %v1137 = vpop.xlane.xlu0 %1136
        %v1138 = vrcp.pop %v1137
        %v1139 = vmul.f32 %v1134, %v1138
        %1140 = vst.msk [vmem:[%s216] sm:$0x1] %vm1128, %v1139
        %s1141 = sand.u32 %s137, 1
        %s1142 = scalar_lea.sflag [#allocation3], %s1141
        %s1143 = sand.u32 %s137, 1
        %s1144 = scalar_lea.vmem [#allocation2], %s1143
        // Predicated region
        $region41: #{cnn_forward.1} parent=39 // pred_check
          %p1145 = pneg %p147
        $region42: #{cnn_forward.1} parent=39 // pred_check_branch
          %1147 = sbr.rel (%p1145) target = $region44
        $region43: #{cnn_forward.1} parent=39 // pred_region
          %s1149 = ssub.s32 16, 16
          %1150 = vsyncadd %s1142, %s1149
          %s1151 = smul.addr %s19, 16
          %s1152 = scalar_lea.hbm %s5, %s1151
          %s1154 = sshll.u32 %s1144, 4
          %s1155 = int_to_ptr.vmem [resolvable:$true] %s1154
          %1157 = dma.vmem_to_hbm [thread:$0]  %s1155, 16, %s1152, %s1142
        $region44: #{cnn_forward.1} parent=39 // pred_fallthru
          _
      $region40: #{cnn_forward.1} parent=5 // pred_fallthru
        _
      %p1158 = scmp.le.s32.totalorder 2, %s14
      // Predicated region
      $region45: #{cnn_forward.1} parent=5 // pred_check
        %p1159 = pneg %p1158
      $region46: #{cnn_forward.1} parent=5 // pred_check_branch
        %1161 = sbr.rel (%p1159) target = $region48
      $region47: #{cnn_forward.1} parent=5 // pred_region
        %s1162 = ssub.s32 %s14, 2
        // Predicated region
        $region49: #{cnn_forward.1} parent=47 // pred_check
          %p1163 = pneg %p153
        $region50: #{cnn_forward.1} parent=47 // pred_check_branch
          %1165 = sbr.rel (%p1163) target = $region52
        $region51: #{cnn_forward.1} parent=47 // pred_region
          %s1166 = sand.u32 %s138, 1
          %s1167 = scalar_lea.sflag [#allocation3], %s1166
          %s1168 = sand.u32 %s138, 1
          %s1169 = scalar_lea.vmem [#allocation2], %s1168
          %1170 = dma.done %s1167, 16
        $region52: #{cnn_forward.1} parent=47 // pred_fallthru
          _
      $region48: #{cnn_forward.1} parent=5 // pred_fallthru
        _
    $region6: #{cnn_forward.1} parent=1 // loop_footer
      %s18 = sadd.s32 1, %s14
    $region7: #{cnn_forward.1} parent=1 // loop_footer_branch
      %13 = sbr.rel target = $region3
    $region8: #{cnn_forward.1} parent=1 // loop_exit
      _
    %1171 = vsyncpa [#allocation3], 1
    %s1172 = scalar_lea.sflag [#allocation3], 1
    %1173 = vsyncpa %s1172, 1

</llo_original>
